<compile_context>
chip_gen: v5e
topology: v5e:2x2
jax: 0.10.0
libtpu: 0.0.40
codegen_flags: <defaults>
</compile_context>

<pallas_src>
import functools
import math

import jax
import jax.numpy as jnp
from jax import lax
from jax.experimental import pallas as pl
from jax.experimental.pallas import tpu as pltpu


# ----------------------------------------------------------------------------
# Generation-aware sizing
# ----------------------------------------------------------------------------
@functools.lru_cache(maxsize=1)
def _hw_config():
    cap = None
    try:
        cap = int(pltpu.get_tpu_info().vmem_capacity_bytes)
    except Exception:
        cap = None
    if cap is not None and cap >= 100 * 1024 * 1024:
        # v5e / v6e: 128 MiB physical VMEM -> bigger tiles, generous scoped limit.
        return {"vmem_limit": min(96 * 1024 * 1024, (cap * 3) // 4), "tm": 512, "tk": 1024}
    # v7x (64 MiB per TC) or unknown backend: conservative tiles, capped scoped limit.
    return {"vmem_limit": 48 * 1024 * 1024, "tm": 256, "tk": 512}


def _round_up(x, m):
    return (x + m - 1) // m * m


def _tile_or_pad(dim, target, align):
    """Pick (tile, padded_dim) with tile | padded_dim and tile aligned (or full-dim)."""
    if dim <= target:
        return dim, dim                      # full-dim block: exempt from (8,128) rule
    t = (target // align) * align
    tt = t
    while tt >= align:
        if dim % tt == 0:
            return tt, dim                   # aligned divisor exists -> no padding
        tt -= align
    return t, _round_up(dim, t)              # pad up to a multiple of the target tile


def _pad2(a, rows, cols):
    r, c = a.shape
    if (r, c) == (rows, cols):
        return a
    return jnp.pad(a, ((0, rows - r), (0, cols - c)))


def _pad1(a, n):
    if a.shape[0] == n:
        return a
    return jnp.pad(a, (0, n - a.shape[0]))


def _gelu(x):
    # tanh-approximate GELU (EUP tanh slot). Differs from HF erf-GELU by ~1e-3 relative.
    c = math.sqrt(2.0 / math.pi)
    return 0.5 * x * (1.0 + jnp.tanh(c * (x + 0.044715 * x * x * x)))


# ----------------------------------------------------------------------------
# Tiled linear kernel with fused bias / GELU / residual-add / LayerNorm epilogue
# ----------------------------------------------------------------------------
def _linear_kernel(*refs, activation, transpose_w, has_residual, has_ln, eps):
    x_ref, w_ref, b_ref = refs[0], refs[1], refs[2]
    pos = 3
    r_ref = g_ref = beta_ref = None
    if has_residual:
        r_ref = refs[pos]; pos += 1
    if has_ln:
        g_ref, beta_ref = refs[pos], refs[pos + 1]; pos += 2
    o_ref, acc_ref = refs[pos], refs[pos + 1]

    @pl.when(pl.program_id(2) == 0)
    def _():
        acc_ref[...] = jnp.zeros_like(acc_ref)

    xb = x_ref[...]
    wb = w_ref[...]
    if xb.dtype != jnp.bfloat16:
        xb = xb.astype(jnp.bfloat16)
    if wb.dtype != jnp.bfloat16:
        wb = wb.astype(jnp.bfloat16)
    if transpose_w:
        # weight stored (N, K); contract on K without materializing a transpose
        acc_ref[...] += lax.dot_general(
            xb, wb, (((1,), (1,)), ((), ())), preferred_element_type=jnp.float32)
    else:
        acc_ref[...] += jnp.dot(xb, wb, preferred_element_type=jnp.float32)

    @pl.when(pl.program_id(2) == pl.num_programs(2) - 1)
    def _():
        out = acc_ref[...] + b_ref[...]
        if activation == "gelu":
            out = _gelu(out)
        if has_residual:
            out = out + r_ref[...].astype(jnp.float32)
        if has_ln:
            mean = jnp.mean(out, axis=-1, keepdims=True)
            var = jnp.mean((out - mean) ** 2, axis=-1, keepdims=True)
            out = (out - mean) * lax.rsqrt(var + eps)
            out = out * g_ref[...] + beta_ref[...]
        o_ref[...] = out.astype(o_ref.dtype)


def linear(x, w, b, *, activation=None, residual=None, ln=None, eps=1e-12,
           transpose_w=False, out_dtype=jnp.bfloat16):
    hw = _hw_config()
    m, kdim = x.shape
    n = w.shape[0] if transpose_w else w.shape[1]
    has_res, has_ln = residual is not None, ln is not None

    tm, m_pad = _tile_or_pad(m, hw["tm"], 8)
    tk, k_pad = _tile_or_pad(kdim, hw["tk"], 128)
    if has_res or has_ln:
        tn, n_pad = n, n           # fused residual/LN reduce over the full feature dim
    else:
        tn, n_pad = _tile_or_pad(n, 256, 128)
    grid = (m_pad // tm, n_pad // tn, k_pad // tk)

    x_p = _pad2(x, m_pad, k_pad)
    w_p = _pad2(w, n_pad, k_pad) if transpose_w else _pad2(w, k_pad, n_pad)
    b_p = _pad1(b, n_pad).reshape(1, n_pad)

    in_specs = [pl.BlockSpec((tm, tk), lambda i, j, k: (i, k))]
    if transpose_w:
        in_specs.append(pl.BlockSpec((tn, tk), lambda i, j, k: (j, k)))
    else:
        in_specs.append(pl.BlockSpec((tk, tn), lambda i, j, k: (k, j)))
    in_specs.append(pl.BlockSpec((1, tn), lambda i, j, k: (0, j)))
    args = [x_p, w_p, b_p]
    if has_res:
        in_specs.append(pl.BlockSpec((tm, tn), lambda i, j, k: (i, j)))
        args.append(_pad2(residual, m_pad, n_pad))
    if has_ln:
        g, beta = ln
        in_specs.append(pl.BlockSpec((1, tn), lambda i, j, k: (0, j)))
        in_specs.append(pl.BlockSpec((1, tn), lambda i, j, k: (0, j)))
        args += [g.reshape(1, n_pad), beta.reshape(1, n_pad)]

    kernel = functools.partial(
        _linear_kernel, activation=activation, transpose_w=transpose_w,
        has_residual=has_res, has_ln=has_ln, eps=eps)

    out = pl.pallas_call(
        kernel,
        out_shape=jax.ShapeDtypeStruct((m_pad, n_pad), out_dtype),
        grid_spec=pltpu.PrefetchScalarGridSpec(
            num_scalar_prefetch=0,
            grid=grid,
            in_specs=in_specs,
            out_specs=pl.BlockSpec((tm, tn), lambda i, j, k: (i, j)),
            scratch_shapes=[pltpu.VMEM((tm, tn), jnp.float32)]),
        compiler_params=pltpu.CompilerParams(
            dimension_semantics=("parallel", "parallel", "arbitrary"),
            vmem_limit_bytes=hw["vmem_limit"]),
    )(*args)
    if (m_pad, n_pad) != (m, n):
        out = out[:m, :n]
    return out


# ----------------------------------------------------------------------------
# Fused embedding-sum + LayerNorm (no f32 sum round-trip through HBM)
# ----------------------------------------------------------------------------
def _emb_ln_kernel(we_ref, te_ref, pe_ref, g_ref, b_ref, o_ref, *, eps):
    x = (we_ref[...].astype(jnp.float32) + te_ref[...].astype(jnp.float32)
         + pe_ref[...].astype(jnp.float32))
    mean = jnp.mean(x, axis=-1, keepdims=True)
    var = jnp.mean((x - mean) ** 2, axis=-1, keepdims=True)
    y = (x - mean) * lax.rsqrt(var + eps) * g_ref[...] + b_ref[...]
    o_ref[...] = y.astype(o_ref.dtype)


def _seq_tile(seq, target=256):
    if seq <= target:
        return seq
    t = (target // 8) * 8
    while t >= 8:
        if seq % t == 0:
            return t
        t -= 8
    return seq


def embed_layernorm(we, te, pe, g, b, *, seq, eps=1e-12):
    T, H = we.shape
    tm = _seq_tile(seq)
    nblk = seq // tm
    hw = _hw_config()
    return pl.pallas_call(
        functools.partial(_emb_ln_kernel, eps=eps),
        out_shape=jax.ShapeDtypeStruct((T, H), jnp.bfloat16),
        grid_spec=pltpu.PrefetchScalarGridSpec(
            num_scalar_prefetch=0, grid=(T // tm,),
            in_specs=[pl.BlockSpec((tm, H), lambda i: (i, 0)),
                      pl.BlockSpec((tm, H), lambda i: (i, 0)),
                      pl.BlockSpec((tm, H), lambda i: (i % nblk, 0)),   # pos table reuse
                      pl.BlockSpec((1, H), lambda i: (0, 0)),
                      pl.BlockSpec((1, H), lambda i: (0, 0))],
            out_specs=pl.BlockSpec((tm, H), lambda i: (i, 0))),
        compiler_params=pltpu.CompilerParams(
            dimension_semantics=("parallel",),
            vmem_limit_bytes=hw["vmem_limit"]),
    )(we, te, pe, g.reshape(1, H), b.reshape(1, H))


# ----------------------------------------------------------------------------
# Attention — reads q/k/v directly from the fused (B*S, 3H) QKV output, packs
# several heads per grid step (lane-dense stores), writes ctx in (B*S, H) layout.
# ----------------------------------------------------------------------------
def _pick_hpack(nh, dh):
    best = 0
    for hp in range(1, nh + 1):
        if nh % hp:
            continue
        w = hp * dh
        if w % 128 == 0 and w <= 512:
            best = hp
    if best == 0:
        best = nh   # TODO(synk): assumes H is a multiple of 128 for exotic head dims.
    return best


def _attention_kernel(q_ref, k_ref, v_ref, m_ref, o_ref, *, hpack, dh, scale):
    mask = m_ref[...]                                        # (1, S) additive bias, f32
    outs = []
    for hi in range(hpack):                                  # static unroll over packed heads
        q = q_ref[:, hi * dh:(hi + 1) * dh]                  # (S, dh) bf16, static slices
        k = k_ref[:, hi * dh:(hi + 1) * dh]
        v = v_ref[:, hi * dh:(hi + 1) * dh]
        s = lax.dot_general(q, k, (((1,), (1,)), ((), ())),
                            preferred_element_type=jnp.float32) * scale
        s = s + mask                                         # broadcast over key axis
        mx = jnp.max(s, axis=-1, keepdims=True)
        p = jnp.exp(s - mx)
        p = p * pl.reciprocal(jnp.sum(p, axis=-1, keepdims=True), approx=True)
        outs.append(jnp.dot(p.astype(jnp.bfloat16), v, preferred_element_type=jnp.float32))
    o_ref[...] = jnp.concatenate(outs, axis=-1).astype(o_ref.dtype)
    # TODO(synk): for long sequences add a KV-tile grid axis with online softmax (flash).


def attention(qkv, mask_bias, *, batch, seq, nheads, dh, hpack, scale):
    T, three_h = qkv.shape
    H = three_h // 3
    W = hpack * dh
    ncol = H // W
    hw = _hw_config()
    kernel = functools.partial(_attention_kernel, hpack=hpack, dh=dh, scale=scale)
    return pl.pallas_call(
        kernel,
        out_shape=jax.ShapeDtypeStruct((T, H), jnp.bfloat16),
        grid_spec=pltpu.PrefetchScalarGridSpec(
            num_scalar_prefetch=0,
            grid=(batch, nheads // hpack),
            in_specs=[pl.BlockSpec((seq, W), lambda b, hb: (b, hb)),              # q
                      pl.BlockSpec((seq, W), lambda b, hb: (b, ncol + hb)),       # k
                      pl.BlockSpec((seq, W), lambda b, hb: (b, 2 * ncol + hb)),   # v
                      pl.BlockSpec((None, 1, seq), lambda b, hb: (b, 0, 0))],     # mask
            out_specs=pl.BlockSpec((seq, W), lambda b, hb: (b, hb))),
        compiler_params=pltpu.CompilerParams(
            dimension_semantics=("parallel", "parallel"),
            vmem_limit_bytes=hw["vmem_limit"]),
    )(qkv, qkv, qkv, mask_bias)


# ----------------------------------------------------------------------------
# Fused tied-decoder matmul + masked-LM cross-entropy (online logsumexp)
# ----------------------------------------------------------------------------
def _decoder_ce_kernel(h_ref, w_ref, b_ref, lab_ref, logits_ref, num_ref, den_ref,
                       m_sc, l_sc, p_sc, *, tv, v_actual, needs_mask):
    vj = pl.program_id(1)
    nv = pl.num_programs(1)

    @pl.when(vj == 0)
    def _():
        m_sc[...] = jnp.full_like(m_sc, -jnp.inf)
        l_sc[...] = jnp.zeros_like(l_sc)
        p_sc[...] = jnp.zeros_like(p_sc)

    hb = h_ref[...]
    wb = w_ref[...]
    if hb.dtype != jnp.bfloat16:
        hb = hb.astype(jnp.bfloat16)
    if wb.dtype != jnp.bfloat16:
        wb = wb.astype(jnp.bfloat16)
    logits = lax.dot_general(hb, wb, (((1,), (1,)), ((), ())),
                             preferred_element_type=jnp.float32) + b_ref[...]   # (tm, tv)
    logits_ref[...] = logits.astype(logits_ref.dtype)

    col = lax.broadcasted_iota(jnp.int32, logits.shape, 1) + vj * tv
    lsm = jnp.where(col < v_actual, logits, -1e30) if needs_mask else logits

    blk_max = jnp.max(lsm, axis=-1, keepdims=True)
    m_new = jnp.maximum(m_sc[...], blk_max)
    l_sc[...] = (l_sc[...] * jnp.exp(m_sc[...] - m_new)
                 + jnp.sum(jnp.exp(lsm - m_new), axis=-1, keepdims=True))
    m_sc[...] = m_new

    labels = lab_ref[...]                                   # (tm, 1) int32, -100 = ignore
    p_sc[...] += jnp.sum(jnp.where(col == labels, logits, 0.0),
                         axis=-1, keepdims=True)

    @pl.when(vj == nv - 1)
    def _():
        lse = m_sc[...] + jnp.log(l_sc[...])
        valid = (labels >= 0).astype(jnp.float32)
        num_ref[...] = (lse - p_sc[...]) * valid            # per-token loss contribution
        den_ref[...] = valid


def decoder_and_loss(h, word_emb, dec_b, labels):
    """h: (T, H) bf16; word_emb: (V, H) bf16 (tied decoder); labels: (T,) int32."""
    hw = _hw_config()
    T, H = h.shape
    V = word_emb.shape[0]
    tm, t_pad = _tile_or_pad(T, hw["tm"], 8)
    tv, v_pad = _tile_or_pad(V, 512, 128)

    h_p = _pad2(h, t_pad, H)
    w_p = _pad2(word_emb, v_pad, H)
    b_p = _pad1(dec_b, v_pad).reshape(1, v_pad)
    lab_p = labels if t_pad == T else jnp.pad(labels, (0, t_pad - T), constant_values=-100)
    lab_p = lab_p.reshape(t_pad, 1)

    kernel = functools.partial(_decoder_ce_kernel, tv=tv, v_actual=V,
                               needs_mask=(v_pad != V))
    logits, tok_num, tok_den = pl.pallas_call(
        kernel,
        out_shape=(jax.ShapeDtypeStruct((t_pad, v_pad), jnp.bfloat16),
                   jax.ShapeDtypeStruct((t_pad, 1), jnp.float32),
                   jax.ShapeDtypeStruct((t_pad, 1), jnp.float32)),
        grid_spec=pltpu.PrefetchScalarGridSpec(
            num_scalar_prefetch=0,
            grid=(t_pad // tm, v_pad // tv),
            in_specs=[pl.BlockSpec((tm, H), lambda i, j: (i, 0)),
                      pl.BlockSpec((tv, H), lambda i, j: (j, 0)),
                      pl.BlockSpec((1, tv), lambda i, j: (0, j)),
                      pl.BlockSpec((tm, 1), lambda i, j: (i, 0))],
            out_specs=[pl.BlockSpec((tm, tv), lambda i, j: (i, j)),
                       pl.BlockSpec((tm, 1), lambda i, j: (i, 0)),
                       pl.BlockSpec((tm, 1), lambda i, j: (i, 0))],
            scratch_shapes=[pltpu.VMEM((tm, 1), jnp.float32),   # running max
                            pltpu.VMEM((tm, 1), jnp.float32),   # running sum-exp
                            pltpu.VMEM((tm, 1), jnp.float32)]), # picked logit
        compiler_params=pltpu.CompilerParams(
            dimension_semantics=("parallel", "arbitrary"),
            vmem_limit_bytes=hw["vmem_limit"]),
    )(h_p, w_p, b_p, lab_p)

    # Padded tokens contribute 0 to both numerator and denominator.
    loss = jnp.sum(tok_num) / jnp.maximum(jnp.sum(tok_den), 1.0)   # 0/0 guard (ref: NaN)
    if (t_pad, v_pad) != (T, V):
        logits = logits[:T, :V]
    return loss, logits


# ----------------------------------------------------------------------------
# Parameter initialization (deterministic, synthetic weights; matmul weights bf16)
# ----------------------------------------------------------------------------
def init_params(key, cfg):
    h, inter, v = cfg["hidden"], cfg["inter"], cfg["vocab"]

    def nxt():
        nonlocal key
        key, sub = jax.random.split(key)
        return sub

    def normal(shape):
        return (0.02 * jax.random.normal(nxt(), shape, jnp.float32)).astype(jnp.bfloat16)

    params = {
        "word_emb": normal((v, h)),
        "pos_emb": normal((cfg["max_pos"], h)),
        "type_emb": normal((cfg["type_vocab"], h)),
        "emb_ln_g": jnp.ones((h,), jnp.float32),
        "emb_ln_b": jnp.zeros((h,), jnp.float32),
        "layers": [],
        "tr_w": normal((h, h)),
        "tr_b": jnp.zeros((h,), jnp.float32),
        "tr_ln_g": jnp.ones((h,), jnp.float32),
        "tr_ln_b": jnp.zeros((h,), jnp.float32),
        "dec_b": jnp.zeros((v,), jnp.float32),   # decoder bias (weight tied to word_emb)
    }
    for _ in range(cfg["layers"]):
        wq, wk, wv = normal((h, h)), normal((h, h)), normal((h, h))
        params["layers"].append({
            "w_qkv": jnp.concatenate([wq, wk, wv], axis=1),     # fused QKV (H, 3H)
            "b_qkv": jnp.zeros((3 * h,), jnp.float32),
            "wo": normal((h, h)), "bo": jnp.zeros((h,), jnp.float32),
            "ln1_g": jnp.ones((h,), jnp.float32), "ln1_b": jnp.zeros((h,), jnp.float32),
            "wi": normal((h, inter)), "bi": jnp.zeros((inter,), jnp.float32),
            "wf": normal((inter, h)), "bf": jnp.zeros((h,), jnp.float32),
            "ln2_g": jnp.ones((h,), jnp.float32), "ln2_b": jnp.zeros((h,), jnp.float32),
        })
    return params


# ----------------------------------------------------------------------------
# PromptEncoder.forward  ==  BertForMaskedLM forward
# ----------------------------------------------------------------------------
def prompt_encoder_forward(params, cfg, input_ids, attention_mask, token_type_ids,
                           labels=None):
    B, S = input_ids.shape
    H, nh, V = cfg["hidden"], cfg["heads"], cfg["vocab"]
    dh = H // nh
    T = B * S

    # --- embeddings: bf16 gathers (glue) + fused sum/LayerNorm Pallas kernel ----------
    we = jnp.take(params["word_emb"], input_ids.reshape(-1), axis=0)       # (T, H) bf16
    te = jnp.take(params["type_emb"], token_type_ids.reshape(-1), axis=0)  # (T, H) bf16
    pe = params["pos_emb"][:S]                                             # (S, H) bf16
    x = embed_layernorm(we, te, pe, params["emb_ln_g"], params["emb_ln_b"], seq=S)

    # --- compact additive mask bias (B,1,S); broadcast inside the attention kernel ----
    mask_bias = ((1.0 - attention_mask.astype(jnp.float32)) * -1e9)[:, None, :]

    scale = 1.0 / math.sqrt(dh)
    hpack = _pick_hpack(nh, dh)
    for lyr in params["layers"]:
        qkv = linear(x, lyr["w_qkv"], lyr["b_qkv"])                 # fused QKV (T, 3H) bf16
        ctx = attention(qkv, mask_bias, batch=B, seq=S, nheads=nh,
                        dh=dh, hpack=hpack, scale=scale)            # (T, H) bf16, head layout
        # attention output projection fused with residual-add + LayerNorm epilogue
        x = linear(ctx, lyr["wo"], lyr["bo"], residual=x,
                   ln=(lyr["ln1_g"], lyr["ln1_b"]))                 # dropout = identity (eval)
        inter = linear(x, lyr["wi"], lyr["bi"], activation="gelu")
        x = linear(inter, lyr["wf"], lyr["bf"], residual=x,
                   ln=(lyr["ln2_g"], lyr["ln2_b"]))                 # dropout = identity (eval)

    # --- MLM head: dense + GELU + LN fused; tied decoder fused with CE when labels ----
    h = linear(x, params["tr_w"], params["tr_b"], activation="gelu",
               ln=(params["tr_ln_g"], params["tr_ln_b"]))

    if labels is None:
        logits = linear(h, params["word_emb"], params["dec_b"], transpose_w=True)
        return logits.reshape(B, S, V)

    loss, logits = decoder_and_loss(h, params["word_emb"], params["dec_b"],
                                    labels.reshape(-1).astype(jnp.int32))
    return loss, logits.reshape(B, S, V)
    # TODO(synk): hidden_states/attentions outputs and pretrained-checkpoint loading of
    # BertForMaskedLM are not reproducible in a self-contained synthetic-weight kernel.


# ----------------------------------------------------------------------------
if __name__ == "__main__":
    cfg = dict(vocab=256, hidden=128, layers=2, heads=2, inter=256,
               max_pos=16, type_vocab=2)
    key = jax.random.PRNGKey(0)
    pkey, ikey = jax.random.split(key)
    params = init_params(pkey, cfg)

    B, S = 2, 8
    input_ids = jax.random.randint(ikey, (B, S), 0, cfg["vocab"], dtype=jnp.int32)
    attention_mask = jnp.array([[1, 1, 1, 1, 1, 1, 1, 1],
                                [1, 1, 1, 1, 1, 1, 0, 0]], dtype=jnp.int32)
    token_type_ids = jnp.concatenate(
        [jnp.zeros((B, 4), jnp.int32), jnp.ones((B, 4), jnp.int32)], axis=1)
    # MLM labels: predict positions 2 and 5, ignore (-100) elsewhere.
    mask_pos = jnp.zeros((B, S), bool).at[:, 2].set(True).at[:, 5].set(True)
    labels = jnp.where(mask_pos, input_ids, -100).astype(jnp.int32)

    loss, logits = prompt_encoder_forward(params, cfg, input_ids, attention_mask,
                                          token_type_ids, labels)
    jax.block_until_ready((loss, logits))
    assert logits.shape == (B, S, cfg["vocab"])
    assert bool(jnp.isfinite(loss))
    print("KERNEL_OK")
</pallas_src>

<mosaic_0001>
module attributes {stable_mosaic.version = 11 : i64} {
  func.func @_emb_ln_kernel(%arg0: i32, %arg1: memref<8x128xbf16, #tpu.memory_space<vmem>>, %arg2: memref<8x128xbf16, #tpu.memory_space<vmem>>, %arg3: memref<8x128xbf16, #tpu.memory_space<vmem>>, %arg4: memref<1x128xf32, #tpu.memory_space<vmem>>, %arg5: memref<1x128xf32, #tpu.memory_space<vmem>>, %arg6: memref<8x128xbf16, #tpu.memory_space<vmem>>) attributes {dimension_semantics = [#tpu.dimension_semantics<parallel>], iteration_bounds = array<i64: 2>, scalar_prefetch = 0 : i64, scratch_operands = 0 : i64, tpu.core_type = #tpu.core_type<tc>, window_params = [{transform_indices = @transform_0, window_bounds = array<i64: 8, 128>}, {transform_indices = @transform_1, window_bounds = array<i64: 8, 128>}, {transform_indices = @transform_2, window_bounds = array<i64: 8, 128>}, {pipeline_mode = #tpu.pipeline_mode<synchronous>, transform_indices = @transform_3, window_bounds = array<i64: 1, 128>}, {pipeline_mode = #tpu.pipeline_mode<synchronous>, transform_indices = @transform_4, window_bounds = array<i64: 1, 128>}, {transform_indices = @transform_5, window_bounds = array<i64: 8, 128>}]} {
    %c0 = arith.constant 0 : index
    %c0_0 = arith.constant 0 : index
    %0 = vector.load %arg1[%c0, %c0_0] : memref<8x128xbf16, #tpu.memory_space<vmem>>, vector<8x128xbf16>
    %1 = arith.extf %0 : vector<8x128xbf16> to vector<8x128xf32>
    %c0_1 = arith.constant 0 : index
    %c0_2 = arith.constant 0 : index
    %2 = vector.load %arg2[%c0_1, %c0_2] : memref<8x128xbf16, #tpu.memory_space<vmem>>, vector<8x128xbf16>
    %3 = arith.extf %2 : vector<8x128xbf16> to vector<8x128xf32>
    %4 = arith.addf %1, %3 : vector<8x128xf32>
    %c0_3 = arith.constant 0 : index
    %c0_4 = arith.constant 0 : index
    %5 = vector.load %arg3[%c0_3, %c0_4] : memref<8x128xbf16, #tpu.memory_space<vmem>>, vector<8x128xbf16>
    %6 = arith.extf %5 : vector<8x128xbf16> to vector<8x128xf32>
    %7 = arith.addf %4, %6 : vector<8x128xf32>
    %cst = arith.constant dense<0.000000e+00> : vector<8xf32>
    %8 = vector.multi_reduction <add>, %7, %cst [1] : vector<8x128xf32> to vector<8xf32>
    %9 = vector.shape_cast %8 : vector<8xf32> to vector<8x1xf32>
    %cst_5 = arith.constant 1.280000e+02 : f32
    %10 = vector.broadcast %cst_5 : f32 to vector<8x1xf32>
    %11 = arith.divf %9, %10 : vector<8x1xf32>
    %12 = vector.broadcast %11 : vector<8x1xf32> to vector<8x128xf32>
    %13 = arith.subf %7, %12 : vector<8x128xf32>
    %14 = arith.mulf %13, %13 : vector<8x128xf32>
    %cst_6 = arith.constant dense<0.000000e+00> : vector<8xf32>
    %15 = vector.multi_reduction <add>, %14, %cst_6 [1] : vector<8x128xf32> to vector<8xf32>
    %16 = vector.shape_cast %15 : vector<8xf32> to vector<8x1xf32>
    %cst_7 = arith.constant 1.280000e+02 : f32
    %17 = vector.broadcast %cst_7 : f32 to vector<8x1xf32>
    %18 = arith.divf %16, %17 : vector<8x1xf32>
    %19 = vector.broadcast %11 : vector<8x1xf32> to vector<8x128xf32>
    %20 = arith.subf %7, %19 : vector<8x128xf32>
    %cst_8 = arith.constant 9.99999996E-13 : f32
    %21 = vector.broadcast %cst_8 : f32 to vector<8x1xf32>
    %22 = arith.addf %18, %21 : vector<8x1xf32>
    %23 = math.rsqrt %22 : vector<8x1xf32>
    %24 = vector.broadcast %23 : vector<8x1xf32> to vector<8x128xf32>
    %25 = arith.mulf %20, %24 : vector<8x128xf32>
    %c0_9 = arith.constant 0 : index
    %c0_10 = arith.constant 0 : index
    %26 = vector.load %arg4[%c0_9, %c0_10] : memref<1x128xf32, #tpu.memory_space<vmem>>, vector<1x128xf32>
    %27 = vector.broadcast %26 : vector<1x128xf32> to vector<8x128xf32>
    %28 = arith.mulf %25, %27 : vector<8x128xf32>
    %c0_11 = arith.constant 0 : index
    %c0_12 = arith.constant 0 : index
    %29 = vector.load %arg5[%c0_11, %c0_12] : memref<1x128xf32, #tpu.memory_space<vmem>>, vector<1x128xf32>
    %30 = vector.broadcast %29 : vector<1x128xf32> to vector<8x128xf32>
    %31 = arith.addf %28, %30 : vector<8x128xf32>
    %32 = arith.truncf %31 : vector<8x128xf32> to vector<8x128xbf16>
    %c0_13 = arith.constant 0 : index
    %c0_14 = arith.constant 0 : index
    %33 = vector.load %arg6[%c0_13, %c0_14] : memref<8x128xbf16, #tpu.memory_space<vmem>>, vector<8x128xbf16>
    tpu.vector_store %arg6[%c0_13, %c0_14], %32 {strides = array<i32>} : memref<8x128xbf16, #tpu.memory_space<vmem>>, vector<8x128xbf16>,
    return
  }
  func.func @transform_0(%arg0: i32) -> (i32, i32) {
    %c0_i32 = arith.constant 0 : i32
    %c0_i32_0 = arith.constant 0 : i32
    return %arg0, %c0_i32 : i32, i32
  }
  func.func @transform_1(%arg0: i32) -> (i32, i32) {
    %c0_i32 = arith.constant 0 : i32
    %c0_i32_0 = arith.constant 0 : i32
    return %arg0, %c0_i32 : i32, i32
  }
  func.func @transform_2(%arg0: i32) -> (i32, i32) {
    %c1_i32 = arith.constant 1 : i32
    %c0_i32 = arith.constant 0 : i32
    %0 = arith.cmpi eq, %c1_i32, %c0_i32 : i32
    %c1_i32_0 = arith.constant 1 : i32
    %1 = arith.select %0, %c1_i32_0, %c1_i32 : i32
    %2 = arith.remsi %arg0, %1 : i32
    %c0_i32_1 = arith.constant 0 : i32
    %3 = arith.cmpi ne, %2, %c0_i32_1 : i32
    %c0_i32_2 = arith.constant 0 : i32
    %4 = arith.cmpi slt, %2, %c0_i32_2 : i32
    %c0_i32_3 = arith.constant 0 : i32
    %5 = arith.cmpi slt, %1, %c0_i32_3 : i32
    %6 = arith.xori %4, %5 : i1
    %7 = arith.andi %6, %3 : i1
    %8 = arith.addi %2, %1 : i32
    %9 = arith.select %7, %8, %2 : i32
    %c0_i32_4 = arith.constant 0 : i32
    %c0_i32_5 = arith.constant 0 : i32
    return %9, %c0_i32_4 : i32, i32
  }
  func.func @transform_3(%arg0: i32) -> (i32, i32) {
    %c0_i32 = arith.constant 0 : i32
    %c0_i32_0 = arith.constant 0 : i32
    %c0_i32_1 = arith.constant 0 : i32
    return %c0_i32, %c0_i32_0 : i32, i32
  }
  func.func @transform_4(%arg0: i32) -> (i32, i32) {
    %c0_i32 = arith.constant 0 : i32
    %c0_i32_0 = arith.constant 0 : i32
    %c0_i32_1 = arith.constant 0 : i32
    return %c0_i32, %c0_i32_0 : i32, i32
  }
  func.func @transform_5(%arg0: i32) -> (i32, i32) {
    %c0_i32 = arith.constant 0 : i32
    %c0_i32_0 = arith.constant 0 : i32
    return %arg0, %c0_i32 : i32, i32
  }
}

</mosaic_0001>

<llo_original>
// kernel: tpu_custom_call.1
$region0: #{tpu_custom_call.1}
  #allocation0 [shape = 'u32[]', space=smem, size = 0x4, offset = 0x4, fixed_abs, tag = 'smem constant byte address 0x4 - core index']
  #allocation1 [shape = 'u32[72,128]{1,0:T(1,128)}', space=vmem, size = 0x9000, scoped, tag = 'internal scratch']
  %s0 = inlined_call_operand.hbm [shape: bf16[16,128], index: 0, kind: input, shape index: {}]
  %s1 = inlined_call_operand.hbm [shape: bf16[16,128], index: 1, kind: input, shape index: {}]
  %s2 = inlined_call_operand.hbm [shape: bf16[8,128], index: 2, kind: input, shape index: {}]
  %s3 = inlined_call_operand.vmem [shape: f32[1,128], index: 3, kind: input, shape index: {}]
  %s4 = inlined_call_operand.vmem [shape: f32[1,128], index: 4, kind: input, shape index: {}]
  %s5 = inlined_call_operand.hbm [shape: bf16[16,128], index: 5, kind: output, shape index: {}]
  %s6 = sld [smem:[#allocation0]]
  $region65: #{tpu_custom_call.1} parent=0
    _
  %s8 = ssub.s32 1, %s6
  %s9 = scalar_select 0, %s8, %s6
  $region1: #{tpu_custom_call.1} parent=0
    #allocation2 [shape = 'u8[4096]{0}', space=vmem, size = 0x1000, scoped, tag = 'input window, operand 0']
    #allocation3 [shape = 's32[2]{0}', space=sflag, size = 0x8, scoped, tag = 'scoped memory for tpu_custom_call.1']
    #allocation4 [shape = 's32[2]{0}', space=sflag, size = 0x8, scoped, tag = 'scoped memory for tpu_custom_call.1']
    #allocation5 [shape = 'u8[4096]{0}', space=vmem, size = 0x1000, scoped, tag = 'input window, operand 1']
    #allocation6 [shape = 's32[2]{0}', space=sflag, size = 0x8, scoped, tag = 'scoped memory for tpu_custom_call.1']
    #allocation7 [shape = 'u8[2048]{0}', space=vmem, size = 0x800, scoped, tag = 'input window, operand 2, single buffered']
    #allocation8 [shape = 'u8[4096]{0}', space=vmem, size = 0x1000, scoped, tag = 'output window, operand 0']
    %10 = vsyncpa [#allocation3], 0
    %s11 = scalar_lea.sflag [#allocation3], 1
    %12 = vsyncpa %s11, 0
    %13 = vsyncpa [#allocation6], 0
    %s14 = scalar_lea.sflag [#allocation6], 1
    %15 = vsyncpa %s14, 0
    %16 = vsyncpa [#allocation4], 0
    %s17 = scalar_lea.sflag [#allocation4], 1
    %18 = vsyncpa %s17, 0
    loop: start=0, step=1, limit=4
    $region2: #{tpu_custom_call.1} parent=1 // loop_pre_header
      _
    $region3: #{tpu_custom_call.1} parent=1 // loop_header
      %s20 = sphi 0, %s24
      %p21 = scmp.ge.s32.totalorder %s20, 4
      %s30 = sphi 0, %s32
      %s33 = sphi 0, %s30
      %s34 = sphi 0, %s33
      %s50 = sphi 0, %s34
      %s56 = sphi 0, %s58
      %s59 = sphi 0, %s56
      %s60 = sphi 0, %s59
      %s76 = sphi 0, %s60
      %s80 = sphi 0, %s80
      %s82 = sphi 0, %s80
      %s83 = sphi 0, %s82
      %s97 = sphi 0, %s83
      %s101 = sphi 0, %s101
      %s103 = sphi 0, %s101
      %s104 = sphi 0, %s103
      %s118 = sphi 0, %s104
      %s122 = sphi 0, %s122
      %s124 = sphi 0, %s122
      %s125 = sphi 0, %s124
      %s139 = sphi 0, %s125
      %s145 = sphi 0, %s147
      %s148 = sphi 0, %s145
      %s149 = sphi 0, %s148
      %s165 = sphi 0, %s149
    $region4: #{tpu_custom_call.1} parent=1 // loop_header_branch
      %23 = sbr.rel (%p21) target = $region8
    $region5: #{tpu_custom_call.1} parent=1 // loop_body
      %s25 = ssub.s32 %s20, 1
      %s26 = ssub.s32 %s20, 2
      %s27 = sadd.s32 %s20, 1
      %s28 = ssub.s32 %s20, %s27
      %p29 = scmp.eq.s32.totalorder %s28, 0
      %s31 = sadd.s32 %s30, 1
      %s32 = scalar_select %p29, %s30, %s31
      %p35 = pneg %p29
      %p36 = scmp.eq.s32.totalorder %s20, 1
      %p37 = por %p35, %p36
      %p38 = scmp.ne.s32.totalorder %s30, %s33
      %p39 = scmp.eq.s32.totalorder %s20, 0
      %p40 = por %p38, %p39
      %p41 = scmp.ne.s32.totalorder %s30, %s33
      %p42 = scmp.eq.s32.totalorder %s25, 1
      %p43 = por %p41, %p42
      %p44 = scmp.ne.s32.totalorder %s33, %s34
      %p45 = scmp.eq.s32.totalorder %s25, 0
      %p46 = por %p44, %p45
      %p47 = scmp.ne.s32.totalorder %s33, %s34
      %p48 = scmp.eq.s32.totalorder %s26, 1
      %p49 = por %p47, %p48
      %p51 = scmp.ne.s32.totalorder %s34, %s50
      %p52 = scmp.eq.s32.totalorder %s26, 0
      %p53 = por %p51, %p52
      %s54 = ssub.s32 %s20, %s27
      %p55 = scmp.eq.s32.totalorder %s54, 0
      %s57 = sadd.s32 %s56, 1
      %s58 = scalar_select %p55, %s56, %s57
      %p61 = pneg %p55
      %p62 = scmp.eq.s32.totalorder %s20, 1
      %p63 = por %p61, %p62
      %p64 = scmp.ne.s32.totalorder %s56, %s59
      %p65 = scmp.eq.s32.totalorder %s20, 0
      %p66 = por %p64, %p65
      %p67 = scmp.ne.s32.totalorder %s56, %s59
      %p68 = scmp.eq.s32.totalorder %s25, 1
      %p69 = por %p67, %p68
      %p70 = scmp.ne.s32.totalorder %s59, %s60
      %p71 = scmp.eq.s32.totalorder %s25, 0
      %p72 = por %p70, %p71
      %p73 = scmp.ne.s32.totalorder %s59, %s60
      %p74 = scmp.eq.s32.totalorder %s26, 1
      %p75 = por %p73, %p74
      %p77 = scmp.ne.s32.totalorder %s60, %s76
      %p78 = scmp.eq.s32.totalorder %s26, 0
      %p79 = por %p77, %p78
      %s81 = sadd.s32 %s80, 1
      %p84 = scmp.eq.s32.totalorder %s20, 1
      %p85 = scmp.ne.s32.totalorder %s80, %s82
      %p86 = scmp.eq.s32.totalorder %s20, 0
      %p87 = por %p85, %p86
      %p88 = scmp.ne.s32.totalorder %s80, %s82
      %p89 = scmp.eq.s32.totalorder %s25, 1
      %p90 = por %p88, %p89
      %p91 = scmp.ne.s32.totalorder %s82, %s83
      %p92 = scmp.eq.s32.totalorder %s25, 0
      %p93 = por %p91, %p92
      %p94 = scmp.ne.s32.totalorder %s82, %s83
      %p95 = scmp.eq.s32.totalorder %s26, 1
      %p96 = por %p94, %p95
      %p98 = scmp.ne.s32.totalorder %s83, %s97
      %p99 = scmp.eq.s32.totalorder %s26, 0
      %p100 = por %p98, %p99
      %s102 = sadd.s32 %s101, 1
      %p105 = scmp.eq.s32.totalorder %s20, 1
      %p106 = scmp.ne.s32.totalorder %s101, %s103
      %p107 = scmp.eq.s32.totalorder %s20, 0
      %p108 = por %p106, %p107
      %p109 = scmp.ne.s32.totalorder %s101, %s103
      %p110 = scmp.eq.s32.totalorder %s25, 1
      %p111 = por %p109, %p110
      %p112 = scmp.ne.s32.totalorder %s103, %s104
      %p113 = scmp.eq.s32.totalorder %s25, 0
      %p114 = por %p112, %p113
      %p115 = scmp.ne.s32.totalorder %s103, %s104
      %p116 = scmp.eq.s32.totalorder %s26, 1
      %p117 = por %p115, %p116
      %p119 = scmp.ne.s32.totalorder %s104, %s118
      %p120 = scmp.eq.s32.totalorder %s26, 0
      %p121 = por %p119, %p120
      %s123 = sadd.s32 %s122, 1
      %p126 = scmp.eq.s32.totalorder %s20, 1
      %p127 = scmp.ne.s32.totalorder %s122, %s124
      %p128 = scmp.eq.s32.totalorder %s20, 0
      %p129 = por %p127, %p128
      %p130 = scmp.ne.s32.totalorder %s122, %s124
      %p131 = scmp.eq.s32.totalorder %s25, 1
      %p132 = por %p130, %p131
      %p133 = scmp.ne.s32.totalorder %s124, %s125
      %p134 = scmp.eq.s32.totalorder %s25, 0
      %p135 = por %p133, %p134
      %p136 = scmp.ne.s32.totalorder %s124, %s125
      %p137 = scmp.eq.s32.totalorder %s26, 1
      %p138 = por %p136, %p137
      %p140 = scmp.ne.s32.totalorder %s125, %s139
      %p141 = scmp.eq.s32.totalorder %s26, 0
      %p142 = por %p140, %p141
      %s143 = ssub.s32 %s20, %s27
      %p144 = scmp.eq.s32.totalorder %s143, 0
      %s146 = sadd.s32 %s145, 1
      %s147 = scalar_select %p144, %s145, %s146
      %p150 = pneg %p144
      %p151 = scmp.eq.s32.totalorder %s20, 1
      %p152 = por %p150, %p151
      %p153 = scmp.ne.s32.totalorder %s145, %s148
      %p154 = scmp.eq.s32.totalorder %s20, 0
      %p155 = por %p153, %p154
      %p156 = scmp.ne.s32.totalorder %s145, %s148
      %p157 = scmp.eq.s32.totalorder %s25, 1
      %p158 = por %p156, %p157
      %p159 = scmp.ne.s32.totalorder %s148, %s149
      %p160 = scmp.eq.s32.totalorder %s25, 0
      %p161 = por %p159, %p160
      %p162 = scmp.ne.s32.totalorder %s148, %s149
      %p163 = scmp.eq.s32.totalorder %s26, 1
      %p164 = por %p162, %p163
      %p166 = scmp.ne.s32.totalorder %s149, %s165
      %p167 = scmp.eq.s32.totalorder %s26, 0
      %p168 = por %p166, %p167
      %p169 = scmp.le.s32.totalorder 1, %s20
      %p170 = scmp.lt.s32.totalorder %s20, 3
      %p171 = pnand %p169, %p170
      %p172 = pneg %p171
      // Predicated region
      $region9: #{tpu_custom_call.1} parent=5 // pred_check
        _
      $region10: #{tpu_custom_call.1} parent=5 // pred_check_branch
        %174 = sbr.rel (%p171) target = $region12
      $region11: #{tpu_custom_call.1} parent=5 // pred_region
        %s175 = ssub.s32 %s20, 1
        // Predicated region
        $region13: #{tpu_custom_call.1} parent=11 // pred_check
          %p176 = pneg %p93
        $region14: #{tpu_custom_call.1} parent=11 // pred_check_branch
          %178 = sbr.rel (%p176) target = $region16
        $region15: #{tpu_custom_call.1} parent=11 // pred_region
          %180 = vsyncadd [#allocation6], 0
          %s182 = sshll.u32 %s2, 4
          %s183 = int_to_ptr.hbm [resolvable:$true] %s182
          %s184 = sshll.u32 [#allocation7], 4
          %s185 = int_to_ptr.vmem [resolvable:$true] %s184
          %187 = dma.hbm_to_vmem [thread:$0]  %s183, 64, %s185, [#allocation6]
        $region16: #{tpu_custom_call.1} parent=11 // pred_fallthru
          _
        // Predicated region
        $region17: #{tpu_custom_call.1} parent=11 // pred_check
          %p188 = pneg %p114
        $region18: #{tpu_custom_call.1} parent=11 // pred_check_branch
          %190 = sbr.rel (%p188) target = $region20
        $region19: #{tpu_custom_call.1} parent=11 // pred_region
          _
        $region20: #{tpu_custom_call.1} parent=11 // pred_fallthru
          _
        // Predicated region
        $region21: #{tpu_custom_call.1} parent=11 // pred_check
          %p191 = pneg %p135
        $region22: #{tpu_custom_call.1} parent=11 // pred_check_branch
          %193 = sbr.rel (%p191) target = $region24
        $region23: #{tpu_custom_call.1} parent=11 // pred_region
          _
        $region24: #{tpu_custom_call.1} parent=11 // pred_fallthru
          _
      $region12: #{tpu_custom_call.1} parent=5 // pred_fallthru
        _
      %p194 = scmp.lt.s32.totalorder %s20, 2
      // Predicated region
      $region25: #{tpu_custom_call.1} parent=5 // pred_check
        %p195 = pneg %p194
      $region26: #{tpu_custom_call.1} parent=5 // pred_check_branch
        %197 = sbr.rel (%p195) target = $region28
      $region27: #{tpu_custom_call.1} parent=5 // pred_region
        // Predicated region
        $region29: #{tpu_custom_call.1} parent=27 // pred_check
          %p198 = pneg %p40
        $region30: #{tpu_custom_call.1} parent=27 // pred_check_branch
          %200 = sbr.rel (%p198) target = $region32
        $region31: #{tpu_custom_call.1} parent=27 // pred_region
          %s201 = sand.u32 %s30, 1
          %s202 = scalar_lea.sflag [#allocation3], %s201
          %s203 = sand.u32 %s30, 1
          %s204 = smul.addr %s203, 4
          %s205 = scalar_lea.vmem [#allocation2], %s204
          %207 = vsyncadd %s202, 0
          %s208 = smul.addr %s20, 4
          %s209 = scalar_lea.hbm %s0, %s208
          %s211 = sshll.u32 %s209, 4
          %s212 = int_to_ptr.hbm [resolvable:$true] %s211
          %s213 = sshll.u32 %s205, 4
          %s214 = int_to_ptr.vmem [resolvable:$true] %s213
          %216 = dma.hbm_to_vmem [thread:$0]  %s212, 64, %s214, %s202
        $region32: #{tpu_custom_call.1} parent=27 // pred_fallthru
          _
        // Predicated region
        $region33: #{tpu_custom_call.1} parent=27 // pred_check
          %p217 = pneg %p66
        $region34: #{tpu_custom_call.1} parent=27 // pred_check_branch
          %219 = sbr.rel (%p217) target = $region36
        $region35: #{tpu_custom_call.1} parent=27 // pred_region
          %s220 = sand.u32 %s20, 1
          %s221 = scalar_lea.sflag [#allocation6], %s220
          %s222 = sand.u32 %s56, 1
          %s223 = smul.addr %s222, 4
          %s224 = scalar_lea.vmem [#allocation5], %s223
          %226 = vsyncadd %s221, 0
          %s227 = smul.addr %s20, 4
          %s228 = scalar_lea.hbm %s1, %s227
          %s230 = sshll.u32 %s228, 4
          %s231 = int_to_ptr.hbm [resolvable:$true] %s230
          %s232 = sshll.u32 %s224, 4
          %s233 = int_to_ptr.vmem [resolvable:$true] %s232
          %235 = dma.hbm_to_vmem [thread:$0]  %s231, 64, %s233, %s221
        $region36: #{tpu_custom_call.1} parent=27 // pred_fallthru
          _
      $region28: #{tpu_custom_call.1} parent=5 // pred_fallthru
        _
      %p236 = scmp.le.s32.totalorder 1, %s20
      %p237 = scmp.lt.s32.totalorder %s20, 3
      %p238 = pnand %p236, %p237
      %p239 = pneg %p238
      // Predicated region
      $region37: #{tpu_custom_call.1} parent=5 // pred_check
        _
      $region38: #{tpu_custom_call.1} parent=5 // pred_check_branch
        %241 = sbr.rel (%p238) target = $region40
      $region39: #{tpu_custom_call.1} parent=5 // pred_region
        %s242 = ssub.s32 %s20, 1
        %s243 = sand.u32 %s33, 1
        %s244 = scalar_lea.sflag [#allocation3], %s243
        %s245 = sand.u32 %s33, 1
        %s246 = smul.addr %s245, 4
        %s247 = scalar_lea.vmem [#allocation2], %s246
        // Predicated region
        $region41: #{tpu_custom_call.1} parent=39 // pred_check
          %p248 = pneg %p46
        $region42: #{tpu_custom_call.1} parent=39 // pred_check_branch
          %250 = sbr.rel (%p248) target = $region44
        $region43: #{tpu_custom_call.1} parent=39 // pred_region
          %252 = dma.done %s244, 64
        $region44: #{tpu_custom_call.1} parent=39 // pred_fallthru
          _
        %s253 = sand.u32 %s25, 1
        %s254 = scalar_lea.sflag [#allocation6], %s253
        %s255 = sand.u32 %s59, 1
        %s256 = smul.addr %s255, 4
        %s257 = scalar_lea.vmem [#allocation5], %s256
        // Predicated region
        $region45: #{tpu_custom_call.1} parent=39 // pred_check
          %p258 = pneg %p72
        $region46: #{tpu_custom_call.1} parent=39 // pred_check_branch
          %260 = sbr.rel (%p258) target = $region48
        $region47: #{tpu_custom_call.1} parent=39 // pred_region
          %262 = dma.done %s254, 64
        $region48: #{tpu_custom_call.1} parent=39 // pred_fallthru
          _
        // Predicated region
        $region49: #{tpu_custom_call.1} parent=39 // pred_check
          %p263 = pneg %p93
        $region50: #{tpu_custom_call.1} parent=39 // pred_check_branch
          %265 = sbr.rel (%p263) target = $region52
        $region51: #{tpu_custom_call.1} parent=39 // pred_region
          %267 = dma.done [#allocation6], 64
        $region52: #{tpu_custom_call.1} parent=39 // pred_fallthru
          _
        %s268 = sand.u32 %s33, 1
        %s269 = scalar_lea.sflag [#allocation3], %s268
        %s270 = sand.u32 %s33, 1
        %s271 = smul.addr %s270, 4
        %s272 = scalar_lea.vmem [#allocation2], %s271
        %p273 = pneg %p46
        %p274 = pneg %p43
        %s275 = sand.u32 %s25, 1
        %s276 = scalar_lea.sflag [#allocation6], %s275
        %s277 = sand.u32 %s59, 1
        %s278 = smul.addr %s277, 4
        %s279 = scalar_lea.vmem [#allocation5], %s278
        %p280 = pneg %p72
        %p281 = pneg %p69
        %p282 = pneg %p93
        %p283 = pneg %p90
        %p284 = pneg %p114
        %p285 = pneg %p111
        %p286 = pneg %p135
        %p287 = pneg %p132
        %p288 = pneg %p161
        %p289 = pneg %p158
        %s290 = sand.u32 %s148, 1
        %s291 = scalar_lea.sflag [#allocation4], %s290
        %s292 = sand.u32 %s148, 1
        %s293 = smul.addr %s292, 4
        %s294 = scalar_lea.vmem [#allocation8], %s293
        %v295 = vld [vmem:[%s247] sm:$0xf]
        %v296 = vunpack.c.l.bf16 %v295
        %v297 = vld [vmem:[%s257] sm:$0xf]
        %v298 = vunpack.c.l.bf16 %v297
        %v299 = vadd.f32 %v296, %v298
        %v300 = vld [vmem:[#allocation7] sm:$0xf]
        %v301 = vunpack.c.l.bf16 %v300
        %v302 = vadd.f32 %v299, %v301
        %303 = vadd.xlane.f32.xlu0 %v302
        %v304 = vpop.xlane.xlu0 %303
        %v305 = vrcp.pop 128.0
        %v306 = vmul.f32 128.0, %v305
        %v307 = vsub.f32 1.0, %v306
        %v308 = vmul.f32 %v305, %v307
        %v309 = vadd.f32 %v305, %v308
        %vm310 = vweird.f32 %v305
        %v311 = vsel %vm310, %v305, %v309
        %v312 = vmul.f32 %v304, %v311
        %v313 = vsub.f32 %v302, %v312
        %v314 = vmul.f32 %v313, %v313
        %315 = vadd.xlane.f32.xlu0 %v314
        %v316 = vpop.xlane.xlu0 %315
        %v317 = vmul.f32 %v316, %v311
        %v318 = vadd.f32 %v317, 1e-12
        %v319 = vrsqrt.pop %v318
        %v320 = vmul.f32 %v319, %v318
        %v321 = vmul.f32 %v320, %v319
        %v322 = vmul.f32 0.5, %v321
        %v323 = vsub.f32 1.5, %v322
        %v324 = vmul.f32 %v319, %v323
        %vm325 = vweird.f32 %v318
        %vm326 = vweird.f32 %v319
        %vm327 = vmor %vm325, %vm326
        %v328 = vsel %vm327, %v319, %v324
        %v329 = vmul.f32 %v313, %v328
        %v330 = vld [vmem:[%s3] sm:$0x1]
        %v332 = vperm.slane %v330, 0
        %v334 = vmul.f32 %v329, %v332
        %v335 = vld [vmem:[%s4] sm:$0x1]
        %v337 = vperm.slane %v335, 0
        %v339 = vadd.f32 %v334, %v337
        %v340 = vpack.c.bf16 %v339, %v339
        %341 = vst [vmem:[%s294] sm:$0xf] %v340
        %s342 = sand.u32 %s148, 1
        %s343 = scalar_lea.sflag [#allocation4], %s342
        %s344 = sand.u32 %s148, 1
        %s345 = smul.addr %s344, 4
        %s346 = scalar_lea.vmem [#allocation8], %s345
        // Predicated region
        $region53: #{tpu_custom_call.1} parent=39 // pred_check
          %p347 = pneg %p158
        $region54: #{tpu_custom_call.1} parent=39 // pred_check_branch
          %349 = sbr.rel (%p347) target = $region56
        $region55: #{tpu_custom_call.1} parent=39 // pred_region
          %351 = vsyncadd %s343, 0
          %s352 = smul.addr %s25, 4
          %s353 = scalar_lea.hbm %s5, %s352
          %s355 = sshll.u32 %s346, 4
          %s356 = int_to_ptr.vmem [resolvable:$true] %s355
          %s357 = sshll.u32 %s353, 4
          %s358 = int_to_ptr.hbm [resolvable:$true] %s357
          %360 = dma.vmem_to_hbm [thread:$0]  %s356, 64, %s358, %s343
        $region56: #{tpu_custom_call.1} parent=39 // pred_fallthru
          _
      $region40: #{tpu_custom_call.1} parent=5 // pred_fallthru
        _
      %p361 = scmp.le.s32.totalorder 2, %s20
      // Predicated region
      $region57: #{tpu_custom_call.1} parent=5 // pred_check
        %p362 = pneg %p361
      $region58: #{tpu_custom_call.1} parent=5 // pred_check_branch
        %364 = sbr.rel (%p362) target = $region60
      $region59: #{tpu_custom_call.1} parent=5 // pred_region
        %s365 = ssub.s32 %s20, 2
        // Predicated region
        $region61: #{tpu_custom_call.1} parent=59 // pred_check
          %p366 = pneg %p164
        $region62: #{tpu_custom_call.1} parent=59 // pred_check_branch
          %368 = sbr.rel (%p366) target = $region64
        $region63: #{tpu_custom_call.1} parent=59 // pred_region
          %s369 = sand.u32 %s149, 1
          %s370 = scalar_lea.sflag [#allocation4], %s369
          %s371 = sand.u32 %s149, 1
          %s372 = smul.addr %s371, 4
          %s373 = scalar_lea.vmem [#allocation8], %s372
          %375 = dma.done %s370, 64
        $region64: #{tpu_custom_call.1} parent=59 // pred_fallthru
          _
      $region60: #{tpu_custom_call.1} parent=5 // pred_fallthru
        _
    $region6: #{tpu_custom_call.1} parent=1 // loop_footer
      %s24 = sadd.s32 1, %s20
    $region7: #{tpu_custom_call.1} parent=1 // loop_footer_branch
      %19 = sbr.rel target = $region3
    $region8: #{tpu_custom_call.1} parent=1 // loop_exit
      _
    %376 = vsyncpa [#allocation3], 1
    %s377 = scalar_lea.sflag [#allocation3], 1
    %378 = vsyncpa %s377, 1
    %379 = vsyncpa [#allocation6], 1
    %s380 = scalar_lea.sflag [#allocation6], 1
    %381 = vsyncpa %s380, 1
    %382 = vsyncpa [#allocation4], 1
    %s383 = scalar_lea.sflag [#allocation4], 1
    %384 = vsyncpa %s383, 1

</llo_original>
